<compile_context>
chip_gen: v5e
topology: v5e:2x2
jax: 0.10.0
libtpu: 0.0.40
codegen_flags: <defaults>
</compile_context>

<pallas_src>
import functools

import jax
import jax.numpy as jnp
from jax.experimental import pallas as pl
from jax.experimental.pallas import tpu as pltpu


def _hybra_conv_kernel(x_ref, w_ref, out_ref, *, Kw, pad):
    # x_ref:   (C, L)   auditory kernels
    # w_ref:   (C, Kw)  per-channel learned kernels
    # out_ref: (C, L)   grouped 'same' cross-correlation result
    x = x_ref[...].astype(jnp.float32)          # load once, keep in vregs
    w = w_ref[...].astype(jnp.float32)
    C, L = x.shape
    lane = jax.lax.broadcasted_iota(jnp.int32, (C, L), 1)

    acc = None
    for k in range(Kw):                         # static unroll over tiny Kw
        s = k - pad                             # out[t] += x[t + s] * w[k]
        if s == 0:
            xs = x
        else:
            # Circular lane rotation so rolled[:, t] == x[:, (t + s) mod L]
            # (XLU slot), then zero the wrapped lanes -> zero 'same' padding.
            rolled = pltpu.roll(x, shift=(-s) % L, axis=1)
            valid = (lane >= -s) if s < 0 else (lane < L - s)
            xs = jnp.where(valid, rolled, 0.0)
        term = xs * w[:, k:k + 1]
        acc = term if acc is None else acc + term
    out_ref[...] = acc.astype(out_ref.dtype)


def hybra_tight_forward(aud_kernels, learned_kernels):
    """Pallas equivalent of HybrATight.forward().

    aud_kernels:     (C, 1, L)   float32 (buffer 'kernels')
    learned_kernels: (C, 1, Kw)  float32 (Kw odd -> symmetric 'same' padding)
    returns:         (C, L)      float32 (== F.conv1d on unbatched (C, L) input)

    C may be the concatenation of several filterbanks' channels (one launch).
    """
    C, _, L = aud_kernels.shape
    Kw = learned_kernels.shape[-1]
    assert Kw % 2 == 1, "odd learned-kernel length keeps 'same' padding symmetric"
    pad = (Kw - 1) // 2
    # Fail loudly for pathologically long learned kernels: the roll-based
    # shifts and edge masks assume each tap shift is smaller than L.
    assert pad < L, "learned kernel too long (pad >= L) for roll-based 'same' padding"

    x = aud_kernels[:, 0, :]                    # (C, L)   glue: squeeze(1)
    w = learned_kernels[:, 0, :]                # (C, Kw)

    cost = pl.CostEstimate(
        flops=2 * C * L * Kw,
        bytes_accessed=4 * (2 * C * L + C * Kw),
        transcendentals=0,
    )

    out = pl.pallas_call(
        functools.partial(_hybra_conv_kernel, Kw=Kw, pad=pad),
        out_shape=jax.ShapeDtypeStruct((C, L), aud_kernels.dtype),
        in_specs=[
            pl.BlockSpec(memory_space=pltpu.MemorySpace.VMEM),
            pl.BlockSpec(memory_space=pltpu.MemorySpace.VMEM),
        ],
        out_specs=pl.BlockSpec(memory_space=pltpu.MemorySpace.VMEM),
        cost_estimate=cost,
    )(x, w)
    return out


if __name__ == "__main__":
    # Module hyper-params (small, consistent with a hybra filterbank):
    C = 8         # num_channels  (aud_kernels.shape[0])
    L = 128       # kernel_size   (aud_kernels.shape[-1]) -- lane friendly
    Kw = 7        # learned kernel length (odd)
    d = 4         # stride  (unused in forward)
    Ls = 256      # signal length (unused in forward)

    key = jax.random.PRNGKey(0)
    k1, k2 = jax.random.split(key)
    aud_kernels = jax.random.normal(k1, (C, 1, L), dtype=jnp.float32) / jnp.sqrt(L)
    learned_kernels = jax.random.normal(k2, (C, 1, Kw), dtype=jnp.float32) / jnp.sqrt(Kw)

    out = hybra_tight_forward(aud_kernels, learned_kernels)
    out = jax.block_until_ready(out)
    assert out.shape == (C, L) and out.dtype == jnp.float32

    # Independent reference: grouped cross-correlation (== torch F.conv1d).
    ref = jax.lax.conv_general_dilated(
        aud_kernels[:, 0, :][None],              # (1, C, L)
        learned_kernels,                         # (C, 1, Kw)  OIW
        window_strides=(1,),
        padding=[((Kw - 1) // 2, (Kw - 1) // 2)],
        dimension_numbers=("NCH", "OIH", "NCH"),
        feature_group_count=C,
    )[0]
    assert jnp.allclose(out, ref, atol=1e-5, rtol=1e-5), "mismatch vs reference conv"

    print("KERNEL_OK")
</pallas_src>

<mosaic_0001>
module attributes {stable_mosaic.version = 11 : i64} {
  func.func @_hybra_conv_kernel(%arg0: memref<8x128xf32, #tpu.memory_space<vmem>>, %arg1: memref<8x7xf32, #tpu.memory_space<vmem>>, %arg2: memref<8x128xf32, #tpu.memory_space<vmem>>) attributes {dimension_semantics = [], scalar_prefetch = 0 : i64, scratch_operands = 0 : i64, tpu.core_type = #tpu.core_type<tc>} {
    %c0 = arith.constant 0 : index
    %c0_0 = arith.constant 0 : index
    %0 = vector.load %arg0[%c0, %c0_0] : memref<8x128xf32, #tpu.memory_space<vmem>>, vector<8x128xf32>
    %c0_1 = arith.constant 0 : index
    %c0_2 = arith.constant 0 : index
    %1 = vector.load %arg1[%c0_1, %c0_2] : memref<8x7xf32, #tpu.memory_space<vmem>>, vector<8x7xf32>
    %2 = tpu.iota {dimensions = array<i32: 1>} : vector<8x128xi32>
    %c3_i32 = arith.constant 3 : i32
    %3 = tpu.dynamic_rotate %0 by %c3_i32 dim 1 : vector<8x128xf32>, i32 -> vector<8x128xf32>
    %c3_i32_3 = arith.constant 3 : i32
    %4 = vector.broadcast %c3_i32_3 : i32 to vector<8x128xi32>
    %5 = arith.cmpi sge, %2, %4 : vector<8x128xi32>
    %cst = arith.constant 0.000000e+00 : f32
    %6 = vector.broadcast %cst : f32 to vector<8x128xf32>
    %7 = arith.select %5, %3, %6 : vector<8x128xi1>, vector<8x128xf32>
    %8 = vector.extract_strided_slice %1 {offsets = [0, 0], sizes = [8, 1], strides = [1, 1]} : vector<8x7xf32> to vector<8x1xf32>
    %9 = vector.broadcast %8 : vector<8x1xf32> to vector<8x128xf32>
    %10 = arith.mulf %7, %9 : vector<8x128xf32>
    %c2_i32 = arith.constant 2 : i32
    %11 = tpu.dynamic_rotate %0 by %c2_i32 dim 1 : vector<8x128xf32>, i32 -> vector<8x128xf32>
    %c2_i32_4 = arith.constant 2 : i32
    %12 = vector.broadcast %c2_i32_4 : i32 to vector<8x128xi32>
    %13 = arith.cmpi sge, %2, %12 : vector<8x128xi32>
    %cst_5 = arith.constant 0.000000e+00 : f32
    %14 = vector.broadcast %cst_5 : f32 to vector<8x128xf32>
    %15 = arith.select %13, %11, %14 : vector<8x128xi1>, vector<8x128xf32>
    %16 = vector.extract_strided_slice %1 {offsets = [0, 1], sizes = [8, 1], strides = [1, 1]} : vector<8x7xf32> to vector<8x1xf32>
    %17 = vector.broadcast %16 : vector<8x1xf32> to vector<8x128xf32>
    %18 = arith.mulf %15, %17 : vector<8x128xf32>
    %19 = arith.addf %10, %18 : vector<8x128xf32>
    %c1_i32 = arith.constant 1 : i32
    %20 = tpu.dynamic_rotate %0 by %c1_i32 dim 1 : vector<8x128xf32>, i32 -> vector<8x128xf32>
    %c1_i32_6 = arith.constant 1 : i32
    %21 = vector.broadcast %c1_i32_6 : i32 to vector<8x128xi32>
    %22 = arith.cmpi sge, %2, %21 : vector<8x128xi32>
    %cst_7 = arith.constant 0.000000e+00 : f32
    %23 = vector.broadcast %cst_7 : f32 to vector<8x128xf32>
    %24 = arith.select %22, %20, %23 : vector<8x128xi1>, vector<8x128xf32>
    %25 = vector.extract_strided_slice %1 {offsets = [0, 2], sizes = [8, 1], strides = [1, 1]} : vector<8x7xf32> to vector<8x1xf32>
    %26 = vector.broadcast %25 : vector<8x1xf32> to vector<8x128xf32>
    %27 = arith.mulf %24, %26 : vector<8x128xf32>
    %28 = arith.addf %19, %27 : vector<8x128xf32>
    %29 = vector.extract_strided_slice %1 {offsets = [0, 3], sizes = [8, 1], strides = [1, 1]} : vector<8x7xf32> to vector<8x1xf32>
    %30 = vector.broadcast %29 : vector<8x1xf32> to vector<8x128xf32>
    %31 = arith.mulf %0, %30 : vector<8x128xf32>
    %32 = arith.addf %28, %31 : vector<8x128xf32>
    %c127_i32 = arith.constant 127 : i32
    %33 = tpu.dynamic_rotate %0 by %c127_i32 dim 1 : vector<8x128xf32>, i32 -> vector<8x128xf32>
    %c127_i32_8 = arith.constant 127 : i32
    %34 = vector.broadcast %c127_i32_8 : i32 to vector<8x128xi32>
    %35 = arith.cmpi slt, %2, %34 : vector<8x128xi32>
    %cst_9 = arith.constant 0.000000e+00 : f32
    %36 = vector.broadcast %cst_9 : f32 to vector<8x128xf32>
    %37 = arith.select %35, %33, %36 : vector<8x128xi1>, vector<8x128xf32>
    %38 = vector.extract_strided_slice %1 {offsets = [0, 4], sizes = [8, 1], strides = [1, 1]} : vector<8x7xf32> to vector<8x1xf32>
    %39 = vector.broadcast %38 : vector<8x1xf32> to vector<8x128xf32>
    %40 = arith.mulf %37, %39 : vector<8x128xf32>
    %41 = arith.addf %32, %40 : vector<8x128xf32>
    %c126_i32 = arith.constant 126 : i32
    %42 = tpu.dynamic_rotate %0 by %c126_i32 dim 1 : vector<8x128xf32>, i32 -> vector<8x128xf32>
    %c126_i32_10 = arith.constant 126 : i32
    %43 = vector.broadcast %c126_i32_10 : i32 to vector<8x128xi32>
    %44 = arith.cmpi slt, %2, %43 : vector<8x128xi32>
    %cst_11 = arith.constant 0.000000e+00 : f32
    %45 = vector.broadcast %cst_11 : f32 to vector<8x128xf32>
    %46 = arith.select %44, %42, %45 : vector<8x128xi1>, vector<8x128xf32>
    %47 = vector.extract_strided_slice %1 {offsets = [0, 5], sizes = [8, 1], strides = [1, 1]} : vector<8x7xf32> to vector<8x1xf32>
    %48 = vector.broadcast %47 : vector<8x1xf32> to vector<8x128xf32>
    %49 = arith.mulf %46, %48 : vector<8x128xf32>
    %50 = arith.addf %41, %49 : vector<8x128xf32>
    %c125_i32 = arith.constant 125 : i32
    %51 = tpu.dynamic_rotate %0 by %c125_i32 dim 1 : vector<8x128xf32>, i32 -> vector<8x128xf32>
    %c125_i32_12 = arith.constant 125 : i32
    %52 = vector.broadcast %c125_i32_12 : i32 to vector<8x128xi32>
    %53 = arith.cmpi slt, %2, %52 : vector<8x128xi32>
    %cst_13 = arith.constant 0.000000e+00 : f32
    %54 = vector.broadcast %cst_13 : f32 to vector<8x128xf32>
    %55 = arith.select %53, %51, %54 : vector<8x128xi1>, vector<8x128xf32>
    %56 = vector.extract_strided_slice %1 {offsets = [0, 6], sizes = [8, 1], strides = [1, 1]} : vector<8x7xf32> to vector<8x1xf32>
    %57 = vector.broadcast %56 : vector<8x1xf32> to vector<8x128xf32>
    %58 = arith.mulf %55, %57 : vector<8x128xf32>
    %59 = arith.addf %50, %58 : vector<8x128xf32>
    %c0_14 = arith.constant 0 : index
    %c0_15 = arith.constant 0 : index
    %60 = vector.load %arg2[%c0_14, %c0_15] : memref<8x128xf32, #tpu.memory_space<vmem>>, vector<8x128xf32>
    tpu.vector_store %arg2[%c0_14, %c0_15], %59 {strides = array<i32>} : memref<8x128xf32, #tpu.memory_space<vmem>>, vector<8x128xf32>,
    return
  }
}

</mosaic_0001>

<llo_original>
// kernel: tpu_custom_call.1
$region0: #{tpu_custom_call.1}
  #allocation0 [shape = 'u32[]', space=smem, size = 0x4, offset = 0x4, fixed_abs, tag = 'smem constant byte address 0x4 - core index']
  #allocation1 [shape = 'u32[72,128]{1,0:T(1,128)}', space=vmem, size = 0x9000, scoped, tag = 'internal scratch']
  %s0 = inlined_call_operand.hbm [shape: f32[8,128], index: 0, kind: input, shape index: {}]
  %s1 = inlined_call_operand.hbm [shape: f32[8,7], index: 1, kind: input, shape index: {}]
  %s2 = inlined_call_operand.hbm [shape: f32[8,128], index: 2, kind: output, shape index: {}]
  %s3 = sld [smem:[#allocation0]]
  $region26: #{tpu_custom_call.1} parent=0
    _
  %s5 = ssub.s32 1, %s3
  %s6 = scalar_select 0, %s5, %s3
  $region1: #{tpu_custom_call.1} parent=0
    #allocation2 [shape = 'u8[4096]{0}', space=vmem, size = 0x1000, scoped, tag = 'input window, operand 0, single buffered']
    #allocation3 [shape = 's32[1]{0}', space=sflag, size = 0x4, scoped, tag = 'scoped memory for tpu_custom_call.1']
    #allocation4 [shape = 's32[1]{0}', space=sflag, size = 0x4, scoped, tag = 'scoped memory for tpu_custom_call.1']
    #allocation5 [shape = 'u8[4096]{0}', space=vmem, size = 0x1000, scoped, tag = 'input window, operand 1, single buffered']
    #allocation6 [shape = 's32[1]{0}', space=sflag, size = 0x4, scoped, tag = 'scoped memory for tpu_custom_call.1']
    #allocation7 [shape = 'u8[4096]{0}', space=vmem, size = 0x1000, scoped, tag = 'output window, operand 0, single buffered']
    %7 = vsyncpa [#allocation3], 0
    %8 = vsyncpa [#allocation6], 0
    %9 = vsyncpa [#allocation4], 0
    // Predicated region
    $region2: #{tpu_custom_call.1} parent=1 // pred_check
      _
    $region3: #{tpu_custom_call.1} parent=1 // pred_check_branch
      %11 = sbr.rel (0) target = $region5
    $region4: #{tpu_custom_call.1} parent=1 // pred_region
      %13 = vsyncadd [#allocation3], 0
      %s15 = sshll.u32 %s0, 4
      %s16 = int_to_ptr.hbm [resolvable:$true] %s15
      %s17 = sshll.u32 [#allocation2], 4
      %s18 = int_to_ptr.vmem [resolvable:$true] %s17
      %20 = dma.hbm_to_vmem [thread:$0]  %s16, 128, %s18, [#allocation3]
    $region5: #{tpu_custom_call.1} parent=1 // pred_fallthru
      _
    // Predicated region
    $region6: #{tpu_custom_call.1} parent=1 // pred_check
      _
    $region7: #{tpu_custom_call.1} parent=1 // pred_check_branch
      %22 = sbr.rel (0) target = $region9
    $region8: #{tpu_custom_call.1} parent=1 // pred_region
      %24 = vsyncadd [#allocation6], 0
      %s26 = sshll.u32 %s1, 4
      %s27 = int_to_ptr.hbm [resolvable:$true] %s26
      %s28 = sshll.u32 [#allocation5], 4
      %s29 = int_to_ptr.vmem [resolvable:$true] %s28
      %31 = dma.hbm_to_vmem [thread:$0]  %s27, 128, %s29, [#allocation6]
    $region9: #{tpu_custom_call.1} parent=1 // pred_fallthru
      _
    // Predicated region
    $region10: #{tpu_custom_call.1} parent=1 // pred_check
      _
    $region11: #{tpu_custom_call.1} parent=1 // pred_check_branch
      %33 = sbr.rel (0) target = $region13
    $region12: #{tpu_custom_call.1} parent=1 // pred_region
      %35 = dma.done [#allocation3], 128
    $region13: #{tpu_custom_call.1} parent=1 // pred_fallthru
      _
    // Predicated region
    $region14: #{tpu_custom_call.1} parent=1 // pred_check
      _
    $region15: #{tpu_custom_call.1} parent=1 // pred_check_branch
      %37 = sbr.rel (0) target = $region17
    $region16: #{tpu_custom_call.1} parent=1 // pred_region
      %39 = dma.done [#allocation6], 128
    $region17: #{tpu_custom_call.1} parent=1 // pred_fallthru
      _
    %v40 = vld [vmem:[#allocation2] sm:$0xff]
    %v41 = vld [vmem:[#allocation5] sm:$0xff]
    %v42 = vlaneseq
    %v43 = vand.u32 %v42, 127
    %44 = vrot.lane.b32.xlu0 %v40, 3
    %v45 = vpop.permute.xlu0 %44
    %vm46 = vcmp.ge.s32.totalorder %v43, 3
    %v47 = vsel %vm46, %v45, 0.0
    %49 = vset.pattern.permute.xlu0 0
    %50 = vperm.xlu0 %49, %v41
    %v51 = vpop.permute.xlu0 %50
    %v53 = vmul.f32 %v47, %v51
    %54 = vrot.lane.b32.xlu0 %v40, 2
    %v55 = vpop.permute.xlu0 %54
    %vm56 = vcmp.ge.s32.totalorder %v43, 2
    %v57 = vsel %vm56, %v55, 0.0
    %58 = vset.pattern.permute.xlu0 1
    %59 = vperm.xlu0 %58, %v41
    %v60 = vpop.permute.xlu0 %59
    %v62 = vmul.f32 %v57, %v60
    %v63 = vadd.f32 %v53, %v62
    %64 = vrot.lane.b32.xlu0 %v40, 1
    %v65 = vpop.permute.xlu0 %64
    %vm66 = vcmp.ge.s32.totalorder %v43, 1
    %v67 = vsel %vm66, %v65, 0.0
    %68 = vset.pattern.permute.xlu0 2
    %69 = vperm.xlu0 %68, %v41
    %v70 = vpop.permute.xlu0 %69
    %v72 = vmul.f32 %v67, %v70
    %v73 = vadd.f32 %v63, %v72
    %74 = vset.pattern.permute.xlu0 3
    %75 = vperm.xlu0 %74, %v41
    %v76 = vpop.permute.xlu0 %75
    %v78 = vmul.f32 %v40, %v76
    %v79 = vadd.f32 %v73, %v78
    %80 = vrot.lane.b32.xlu0 %v40, 127
    %v81 = vpop.permute.xlu0 %80
    %vm82 = vcmp.lt.s32.totalorder %v43, 127
    %v83 = vsel %vm82, %v81, 0.0
    %84 = vset.pattern.permute.xlu0 4
    %85 = vperm.xlu0 %84, %v41
    %v86 = vpop.permute.xlu0 %85
    %v88 = vmul.f32 %v83, %v86
    %v89 = vadd.f32 %v79, %v88
    %90 = vrot.lane.b32.xlu0 %v40, 126
    %v91 = vpop.permute.xlu0 %90
    %vm92 = vcmp.lt.s32.totalorder %v43, 126
    %v93 = vsel %vm92, %v91, 0.0
    %94 = vset.pattern.permute.xlu0 5
    %95 = vperm.xlu0 %94, %v41
    %v96 = vpop.permute.xlu0 %95
    %v98 = vmul.f32 %v93, %v96
    %v99 = vadd.f32 %v89, %v98
    %100 = vrot.lane.b32.xlu0 %v40, 125
    %v101 = vpop.permute.xlu0 %100
    %vm102 = vcmp.lt.s32.totalorder %v43, 125
    %v103 = vsel %vm102, %v101, 0.0
    %104 = vset.pattern.permute.xlu0 6
    %105 = vperm.xlu0 %104, %v41
    %v106 = vpop.permute.xlu0 %105
    %v108 = vmul.f32 %v103, %v106
    %v109 = vadd.f32 %v99, %v108
    %110 = vst [vmem:[#allocation7] sm:$0xff] %v109
    // Predicated region
    $region18: #{tpu_custom_call.1} parent=1 // pred_check
      _
    $region19: #{tpu_custom_call.1} parent=1 // pred_check_branch
      %112 = sbr.rel (0) target = $region21
    $region20: #{tpu_custom_call.1} parent=1 // pred_region
      %114 = vsyncadd [#allocation4], 0
      %s116 = sshll.u32 [#allocation7], 4
      %s117 = int_to_ptr.vmem [resolvable:$true] %s116
      %s118 = sshll.u32 %s2, 4
      %s119 = int_to_ptr.hbm [resolvable:$true] %s118
      %121 = dma.vmem_to_hbm [thread:$0]  %s117, 128, %s119, [#allocation4]
    $region21: #{tpu_custom_call.1} parent=1 // pred_fallthru
      _
    // Predicated region
    $region22: #{tpu_custom_call.1} parent=1 // pred_check
      _
    $region23: #{tpu_custom_call.1} parent=1 // pred_check_branch
      %123 = sbr.rel (0) target = $region25
    $region24: #{tpu_custom_call.1} parent=1 // pred_region
      %125 = dma.done [#allocation4], 128
    $region25: #{tpu_custom_call.1} parent=1 // pred_fallthru
      _
    %126 = vsyncpa [#allocation3], 1
    %127 = vsyncpa [#allocation6], 1
    %128 = vsyncpa [#allocation4], 1

</llo_original>
